<compile_context>
chip_gen: v6e
topology: v6e:2x2x1
jax: 0.10.0
libtpu: 0.0.40
codegen_flags: <defaults>
</compile_context>

<pallas_src>
import jax
import jax.numpy as jnp
from jax import lax
from jax.experimental import pallas as pl
from jax.experimental.pallas import tpu as pltpu


_INV_SQRT2 = 0.7071067811865476
_SQRT_2_OVER_PI = 0.7978845608028654


def _gelu_exact(x):
    # Exact erf GELU — matches torch.nn.GELU() default.
    return 0.5 * x * (1.0 + lax.erf(x * _INV_SQRT2))


def _gelu_tanh(x):
    # tanh-approx GELU: routes the transcendental through the EUP slot
    # (bf16-capable on v6e/v7x) instead of a long VPU erf polynomial.
    # TODO(synk): deviates ~1e-3 from torch's exact erf GELU; opt-in only.
    inner = _SQRT_2_OVER_PI * (x + 0.044715 * (x * x * x))
    return 0.5 * x * (1.0 + jnp.tanh(inner))


# ----------------------------------------------------------------------------
# Kernels
# ----------------------------------------------------------------------------
def _make_fused_kernel(approx_gelu):
    """Weight-resident path: 1-D grid over row tiles, result written directly."""
    act = _gelu_tanh if approx_gelu else _gelu_exact

    def kernel(x_ref, w1_ref, b1_ref, w2_ref, b2_ref, o_ref):
        h = jnp.dot(x_ref[...], w1_ref[...], preferred_element_type=jnp.float32)
        h = act(h + b1_ref[...].astype(jnp.float32))
        # dropout p=0.0 -> identity
        y = jnp.dot(h.astype(w2_ref.dtype), w2_ref[...],
                    preferred_element_type=jnp.float32)
        o_ref[...] = (y + b2_ref[...].astype(jnp.float32)).astype(o_ref.dtype)

    return kernel


def _make_stream_kernel(approx_gelu):
    """Hidden-dim streaming path: grid = (row_tiles, hidden_tiles>=2)."""
    act = _gelu_tanh if approx_gelu else _gelu_exact

    def kernel(x_ref, w1_ref, b1_ref, w2_ref, b2_ref, o_ref, acc_ref):
        k = pl.program_id(1)
        nk = pl.num_programs(1)

        h = jnp.dot(x_ref[...], w1_ref[...], preferred_element_type=jnp.float32)
        h = act(h + b1_ref[...].astype(jnp.float32))
        part = jnp.dot(h.astype(w2_ref.dtype), w2_ref[...],
                       preferred_element_type=jnp.float32)

        @pl.when(k == 0)
        def _first():                 # no zero-init, straight assign
            acc_ref[...] = part

        @pl.when(jnp.logical_and(k > 0, k < nk - 1))
        def _middle():
            acc_ref[...] = acc_ref[...] + part

        @pl.when(k == nk - 1)
        def _last():                  # fuse last partial + bias into the store
            o_ref[...] = (acc_ref[...] + part
                          + b2_ref[...].astype(jnp.float32)).astype(o_ref.dtype)

    return kernel


# ----------------------------------------------------------------------------
# Sizing helpers
# ----------------------------------------------------------------------------
def _round_up(v, m):
    return (v + m - 1) // m * m


def _tpu_vmem_capacity_bytes():
    try:
        info = pltpu.get_tpu_info()
        cap = getattr(info, "vmem_capacity_bytes", None)
        if cap:
            return int(cap)
    except Exception:
        pass
    return 64 * 1024 * 1024  # conservative default (v7x per-TensorCore)


def _streaming_tile_candidates(h):
    """128-aligned proper divisors of H, largest first."""
    return [t for t in range(h - 128, 0, -128) if h % t == 0]


def _vmem_estimate(bm, tile_h, d_in, d_out, x_bytes, w_bytes, out_bytes, streaming):
    wbuf = 2 if streaming else 1          # invariant weights single-buffered
    est = (2 * bm * d_in * x_bytes        # x tile (double-buffered)
           + 2 * bm * d_out * out_bytes   # out tile (double-buffered)
           + wbuf * d_in * tile_h * w_bytes
           + wbuf * tile_h * d_out * w_bytes
           + wbuf * tile_h * w_bytes + 2 * d_out * w_bytes
           + 2 * bm * tile_h * 4          # f32 fc1/GELU intermediates
           + bm * d_out * 4)              # fc2 partial
    if streaming:
        est += bm * d_out * 4             # f32 accumulator scratch
    return est


def _block_spec(shape, index_map, single_buffer=False):
    """BlockSpec; single-buffer grid-invariant blocks to halve their VMEM."""
    if single_buffer and hasattr(pl, "Buffered"):
        try:
            return pl.BlockSpec(shape, index_map, pipeline_mode=pl.Buffered(1))
        except TypeError:
            pass
    return pl.BlockSpec(shape, index_map)


# ----------------------------------------------------------------------------
# Wrapper
# ----------------------------------------------------------------------------
def mlp_pallas(x, w1, b1, w2, b2, *, block_m=256, approx_gelu=False,
               mxu_dtype=None, max_tile_h=None):
    """ViT MLP forward.

      x : (B, N, D_in);  w1:(D_in,H);  b1:(H,);  w2:(H,D_out);  b2:(D_out,)
      (weights transposed vs. torch.nn.Linear)

    mxu_dtype : optional matmul operand dtype (e.g. jnp.bfloat16) — accumulation
                stays f32, output keeps x.dtype.  Default: no cast.
    approx_gelu : use tanh GELU (EUP-friendly) instead of exact erf.
    max_tile_h : debug/override cap on the hidden tile (forces streaming).
    """
    B, N, D_in = x.shape
    H = w1.shape[1]
    D_out = w2.shape[1]
    M = B * N
    out_dtype = x.dtype

    if mxu_dtype is not None:
        x = x.astype(mxu_dtype)
        w1 = w1.astype(mxu_dtype)
        w2 = w2.astype(mxu_dtype)

    x_bytes = jnp.dtype(x.dtype).itemsize
    w_bytes = jnp.dtype(w1.dtype).itemsize
    out_bytes = jnp.dtype(out_dtype).itemsize

    # Minimum sublane multiple for the row (second-to-last) dim.
    min_sub = max(8, 32 // x_bytes)

    # Rows: pad only to the sublane multiple (cheap).  A ragged last row tile
    # is handled by Pallas partial-block masking (reads padded, writes dropped),
    # so no bm-multiple pad/slice copies are needed.
    M_pad = _round_up(max(M, 1), min_sub)
    bm = min(_round_up(block_m, min_sub), M_pad)

    # Generation-aware VMEM budget (v5e/v6e: 128 MiB, v7x: 64 MiB per core);
    # leave ~20% headroom for Mosaic internal scratch / semaphores.
    budget = int(0.8 * _tpu_vmem_capacity_bytes())

    # Prefer full weight residency (tile_h == H); fall back to streaming.
    tile_h, streaming = H, False
    bm_try = bm
    while True:
        allow_resident = (max_tile_h is None) or (max_tile_h >= H)
        if allow_resident and _vmem_estimate(
                bm_try, H, D_in, D_out, x_bytes, w_bytes, out_bytes,
                streaming=False) <= budget:
            tile_h, streaming, bm = H, False, bm_try
            break
        cands = _streaming_tile_candidates(H)
        if max_tile_h is not None:
            cands = [t for t in cands if t <= max_tile_h]
        fit = [t for t in cands
               if _vmem_estimate(bm_try, t, D_in, D_out, x_bytes, w_bytes,
                                 out_bytes, streaming=True) <= budget]
        if fit:
            tile_h, streaming, bm = fit[0], True, bm_try
            break
        if bm_try > min_sub:
            bm_try = max(min_sub, _round_up(bm_try // 2, min_sub))
            continue
        # Nothing fits cleanly (e.g. odd H with no 128-aligned divisor):
        # run weight-resident anyway under the scoped limit (may spill).
        # TODO(synk): pad H to a 128 multiple (zero fc1 cols / fc2 rows) instead.
        tile_h, streaming, bm = H, False, bm_try
        break

    n_m = (M_pad + bm - 1) // bm
    n_h = (H // tile_h) if streaming else 1

    x2d = x.reshape(M, D_in)
    if M_pad != M:
        x2d = jnp.pad(x2d, ((0, M_pad - M), (0, 0)))
    b1_2d = b1.reshape(1, H)
    b2_2d = b2.reshape(1, D_out)

    weight_bytes = (D_in * H + H * D_out + H + D_out) * w_bytes
    cost = pl.CostEstimate(
        flops=2 * M * (D_in * H + H * D_out),
        transcendentals=M * H,
        bytes_accessed=M * (D_in * x_bytes + D_out * out_bytes)
        + weight_bytes * (n_m if streaming else 1),   # account weight re-reads
    )
    compiler_params = pltpu.CompilerParams(
        dimension_semantics=(("parallel",) if not streaming
                             else ("parallel", "arbitrary")),
        vmem_limit_bytes=budget,
    )

    def _build_call(single_buffer):
        if not streaming:
            grid_spec = pltpu.PrefetchScalarGridSpec(
                num_scalar_prefetch=0,
                grid=(n_m,),
                in_specs=[
                    pl.BlockSpec((bm, D_in), lambda i: (i, 0)),
                    _block_spec((D_in, H), lambda i: (0, 0), single_buffer),
                    _block_spec((1, H), lambda i: (0, 0), single_buffer),
                    _block_spec((H, D_out), lambda i: (0, 0), single_buffer),
                    _block_spec((1, D_out), lambda i: (0, 0), single_buffer),
                ],
                out_specs=pl.BlockSpec((bm, D_out), lambda i: (i, 0)),
                scratch_shapes=[],
            )
            kernel = _make_fused_kernel(approx_gelu)
        else:
            grid_spec = pltpu.PrefetchScalarGridSpec(
                num_scalar_prefetch=0,
                grid=(n_m, n_h),
                in_specs=[
                    pl.BlockSpec((bm, D_in), lambda i, k: (i, 0)),
                    pl.BlockSpec((D_in, tile_h), lambda i, k: (0, k)),
                    pl.BlockSpec((1, tile_h), lambda i, k: (0, k)),
                    pl.BlockSpec((tile_h, D_out), lambda i, k: (k, 0)),
                    _block_spec((1, D_out), lambda i, k: (0, 0), single_buffer),
                ],
                out_specs=pl.BlockSpec((bm, D_out), lambda i, k: (i, 0)),
                scratch_shapes=[pltpu.VMEM((bm, D_out), jnp.float32)],
            )
            kernel = _make_stream_kernel(approx_gelu)
        return pl.pallas_call(
            kernel,
            out_shape=jax.ShapeDtypeStruct((M_pad, D_out), out_dtype),
            grid_spec=grid_spec,
            compiler_params=compiler_params,
            cost_estimate=cost,
        )

    try:
        out2d = _build_call(True)(x2d, w1, b1_2d, w2, b2_2d)
    except Exception:
        # pl.Buffered(1) (single-buffered invariant blocks) unsupported here —
        # fall back to default double-buffering.
        out2d = _build_call(False)(x2d, w1, b1_2d, w2, b2_2d)

    if M_pad != M:
        out2d = out2d[:M]
    return out2d.reshape(B, N, D_out)


def mlp_reference(x, w1, b1, w2, b2, approx_gelu=False):
    act = _gelu_tanh if approx_gelu else _gelu_exact
    h = act(jnp.einsum("bnd,dh->bnh", x, w1) + b1)
    return jnp.einsum("bnh,ho->bno", h, w2) + b2


if __name__ == "__main__":
    key = jax.random.PRNGKey(0)
    (k_x, k_w1, k_b1, k_w2, k_b2, k_x2,
     k_w1b, k_b1b, k_w2b, k_b2b) = jax.random.split(key, 10)

    # Small shapes consistent with the module: tokens (B, N, D_in).
    B, N = 2, 8
    in_features, hidden_features, out_features = 32, 64, 32
    dtype = jnp.float32

    x = jax.random.normal(k_x, (B, N, in_features), dtype=dtype)
    w1 = jax.random.normal(k_w1, (in_features, hidden_features), dtype=dtype) * 0.05
    b1 = jax.random.normal(k_b1, (hidden_features,), dtype=dtype) * 0.05
    w2 = jax.random.normal(k_w2, (hidden_features, out_features), dtype=dtype) * 0.05
    b2 = jax.random.normal(k_b2, (out_features,), dtype=dtype) * 0.05

    # 1) Weight-resident fused path (exact erf GELU == torch.nn.GELU()).
    y = mlp_pallas(x, w1, b1, w2, b2)
    jax.block_until_ready(y)
    y_ref = mlp_reference(x, w1, b1, w2, b2)
    assert y.shape == (B, N, out_features)
    assert jnp.allclose(y, y_ref, atol=2e-4, rtol=2e-4), "resident path mismatch"

    # 2) Ragged token count (like a 197-token ViT sequence): sublane-only pad.
    x_odd = jax.random.normal(k_x2, (1, 5, in_features), dtype=dtype)
    y_odd = mlp_pallas(x_odd, w1, b1, w2, b2)
    jax.block_until_ready(y_odd)
    y_odd_ref = mlp_reference(x_odd, w1, b1, w2, b2)
    assert jnp.allclose(y_odd, y_odd_ref, atol=2e-4, rtol=2e-4), "ragged path mismatch"

    # 3) Hidden-dim streaming fallback path (forced via max_tile_h).
    H2 = 256
    w1b = jax.random.normal(k_w1b, (in_features, H2), dtype=dtype) * 0.05
    b1b = jax.random.normal(k_b1b, (H2,), dtype=dtype) * 0.05
    w2b = jax.random.normal(k_w2b, (H2, out_features), dtype=dtype) * 0.05
    b2b = jax.random.normal(k_b2b, (out_features,), dtype=dtype) * 0.05
    y_s = mlp_pallas(x, w1b, b1b, w2b, b2b, max_tile_h=128)
    jax.block_until_ready(y_s)
    y_s_ref = mlp_reference(x, w1b, b1b, w2b, b2b)
    assert jnp.allclose(y_s, y_s_ref, atol=2e-4, rtol=2e-4), "streaming path mismatch"

    # 4) bf16-MXU + tanh-GELU perf path (inference option); loose check.
    y_bf = mlp_pallas(x, w1, b1, w2, b2, mxu_dtype=jnp.bfloat16, approx_gelu=True)
    jax.block_until_ready(y_bf)
    assert y_bf.shape == (B, N, out_features)
    assert bool(jnp.all(jnp.isfinite(y_bf.astype(jnp.float32))))
    assert jnp.allclose(y_bf, y_ref, atol=5e-2, rtol=5e-2), "bf16 path diverged"

    print("KERNEL_OK")
</pallas_src>

<mosaic_0001>
module attributes {stable_mosaic.version = 11 : i64} {
  func.func @kernel(%arg0: i32, %arg1: memref<16x32xf32, #tpu.memory_space<vmem>>, %arg2: memref<32x64xf32, #tpu.memory_space<vmem>>, %arg3: memref<1x64xf32, #tpu.memory_space<vmem>>, %arg4: memref<64x32xf32, #tpu.memory_space<vmem>>, %arg5: memref<1x32xf32, #tpu.memory_space<vmem>>, %arg6: memref<16x32xf32, #tpu.memory_space<vmem>>) attributes {dimension_semantics = [#tpu.dimension_semantics<parallel>], iteration_bounds = array<i64: 1>, scalar_prefetch = 0 : i64, scratch_operands = 0 : i64, tpu.core_type = #tpu.core_type<tc>, window_params = [{transform_indices = @transform_0, window_bounds = array<i64: 16, 32>}, {pipeline_mode = #tpu.pipeline_mode<synchronous>, transform_indices = @transform_1, window_bounds = array<i64: 32, 64>}, {pipeline_mode = #tpu.pipeline_mode<synchronous>, transform_indices = @transform_2, window_bounds = array<i64: 1, 64>}, {pipeline_mode = #tpu.pipeline_mode<synchronous>, transform_indices = @transform_3, window_bounds = array<i64: 64, 32>}, {pipeline_mode = #tpu.pipeline_mode<synchronous>, transform_indices = @transform_4, window_bounds = array<i64: 1, 32>}, {transform_indices = @transform_5, window_bounds = array<i64: 16, 32>}]} {
    %c0 = arith.constant 0 : index
    %c0_0 = arith.constant 0 : index
    %0 = vector.load %arg1[%c0, %c0_0] : memref<16x32xf32, #tpu.memory_space<vmem>>, vector<16x32xf32>
    %c0_1 = arith.constant 0 : index
    %c0_2 = arith.constant 0 : index
    %1 = vector.load %arg2[%c0_1, %c0_2] : memref<32x64xf32, #tpu.memory_space<vmem>>, vector<32x64xf32>
    %cst = arith.constant dense<0.000000e+00> : vector<16x64xf32>
    %2 = tpu.matmul %0, %1, %cst {dimension_numbers = #tpu.dot_dimension_numbers<[1], [0], [0], [1], [0, 0, 1, 1], [], []>} : vector<16x32xf32>, vector<32x64xf32>, vector<16x64xf32> -> vector<16x64xf32>
    %c0_3 = arith.constant 0 : index
    %c0_4 = arith.constant 0 : index
    %3 = vector.load %arg3[%c0_3, %c0_4] : memref<1x64xf32, #tpu.memory_space<vmem>>, vector<1x64xf32>
    %4 = vector.broadcast %3 : vector<1x64xf32> to vector<16x64xf32>
    %5 = arith.addf %2, %4 : vector<16x64xf32>
    %cst_5 = arith.constant 5.000000e-01 : f32
    %6 = vector.broadcast %cst_5 : f32 to vector<16x64xf32>
    %7 = arith.mulf %6, %5 : vector<16x64xf32>
    %cst_6 = arith.constant 0.707106769 : f32
    %8 = vector.broadcast %cst_6 : f32 to vector<16x64xf32>
    %9 = arith.mulf %5, %8 : vector<16x64xf32>
    %10 = math.erf %9 : vector<16x64xf32>
    %cst_7 = arith.constant 1.000000e+00 : f32
    %11 = vector.broadcast %cst_7 : f32 to vector<16x64xf32>
    %12 = arith.addf %11, %10 : vector<16x64xf32>
    %13 = arith.mulf %7, %12 : vector<16x64xf32>
    %c0_8 = arith.constant 0 : index
    %c0_9 = arith.constant 0 : index
    %14 = vector.load %arg4[%c0_8, %c0_9] : memref<64x32xf32, #tpu.memory_space<vmem>>, vector<64x32xf32>
    %cst_10 = arith.constant dense<0.000000e+00> : vector<16x32xf32>
    %15 = tpu.matmul %13, %14, %cst_10 {dimension_numbers = #tpu.dot_dimension_numbers<[1], [0], [0], [1], [0, 0, 1, 1], [], []>} : vector<16x64xf32>, vector<64x32xf32>, vector<16x32xf32> -> vector<16x32xf32>
    %c0_11 = arith.constant 0 : index
    %c0_12 = arith.constant 0 : index
    %16 = vector.load %arg5[%c0_11, %c0_12] : memref<1x32xf32, #tpu.memory_space<vmem>>, vector<1x32xf32>
    %17 = vector.broadcast %16 : vector<1x32xf32> to vector<16x32xf32>
    %18 = arith.addf %15, %17 : vector<16x32xf32>
    %c0_13 = arith.constant 0 : index
    %c0_14 = arith.constant 0 : index
    %19 = vector.load %arg6[%c0_13, %c0_14] : memref<16x32xf32, #tpu.memory_space<vmem>>, vector<16x32xf32>
    tpu.vector_store %arg6[%c0_13, %c0_14], %18 {strides = array<i32>} : memref<16x32xf32, #tpu.memory_space<vmem>>, vector<16x32xf32>,
    return
  }
  func.func @transform_0(%arg0: i32) -> (i32, i32) {
    %c0_i32 = arith.constant 0 : i32
    %c0_i32_0 = arith.constant 0 : i32
    return %arg0, %c0_i32 : i32, i32
  }
  func.func @transform_1(%arg0: i32) -> (i32, i32) {
    %c0_i32 = arith.constant 0 : i32
    %c0_i32_0 = arith.constant 0 : i32
    %c0_i32_1 = arith.constant 0 : i32
    return %c0_i32, %c0_i32_0 : i32, i32
  }
  func.func @transform_2(%arg0: i32) -> (i32, i32) {
    %c0_i32 = arith.constant 0 : i32
    %c0_i32_0 = arith.constant 0 : i32
    %c0_i32_1 = arith.constant 0 : i32
    return %c0_i32, %c0_i32_0 : i32, i32
  }
  func.func @transform_3(%arg0: i32) -> (i32, i32) {
    %c0_i32 = arith.constant 0 : i32
    %c0_i32_0 = arith.constant 0 : i32
    %c0_i32_1 = arith.constant 0 : i32
    return %c0_i32, %c0_i32_0 : i32, i32
  }
  func.func @transform_4(%arg0: i32) -> (i32, i32) {
    %c0_i32 = arith.constant 0 : i32
    %c0_i32_0 = arith.constant 0 : i32
    %c0_i32_1 = arith.constant 0 : i32
    return %c0_i32, %c0_i32_0 : i32, i32
  }
  func.func @transform_5(%arg0: i32) -> (i32, i32) {
    %c0_i32 = arith.constant 0 : i32
    %c0_i32_0 = arith.constant 0 : i32
    return %arg0, %c0_i32 : i32, i32
  }
}

module attributes {stable_mosaic.version = 11 : i64} {
  func.func @kernel(%arg0: i32, %arg1: memref<16x32xf32, #tpu.memory_space<vmem>>, %arg2: memref<32x64xf32, #tpu.memory_space<vmem>>, %arg3: memref<1x64xf32, #tpu.memory_space<vmem>>, %arg4: memref<64x32xf32, #tpu.memory_space<vmem>>, %arg5: memref<1x32xf32, #tpu.memory_space<vmem>>, %arg6: memref<16x32xf32, #tpu.memory_space<vmem>>) attributes {dimension_semantics = [#tpu.dimension_semantics<parallel>], iteration_bounds = array<i64: 1>, scalar_prefetch = 0 : i64, scratch_operands = 0 : i64, tpu.core_type = #tpu.core_type<tc>, window_params = [{transform_indices = @transform_0, window_bounds = array<i64: 16, 32>}, {pipeline_mode = #tpu.pipeline_mode<synchronous>, transform_indices = @transform_1, window_bounds = array<i64: 32, 64>}, {pipeline_mode = #tpu.pipeline_mode<synchronous>, transform_indices = @transform_2, window_bounds = array<i64: 1, 64>}, {pipeline_mode = #tpu.pipeline_mode<synchronous>, transform_indices = @transform_3, window_bounds = array<i64: 64, 32>}, {pipeline_mode = #tpu.pipeline_mode<synchronous>, transform_indices = @transform_4, window_bounds = array<i64: 1, 32>}, {transform_indices = @transform_5, window_bounds = array<i64: 16, 32>}]} {
    %c0 = arith.constant 0 : index
    %c0_0 = arith.constant 0 : index
    %0 = vector.load %arg1[%c0, %c0_0] : memref<16x32xf32, #tpu.memory_space<vmem>>, vector<16x32xf32>
    %c0_1 = arith.constant 0 : index
    %c0_2 = arith.constant 0 : index
    %1 = vector.load %arg2[%c0_1, %c0_2] : memref<32x64xf32, #tpu.memory_space<vmem>>, vector<32x64xf32>
    %cst = arith.constant dense<0.000000e+00> : vector<16x64xf32>
    %2 = tpu.matmul %0, %1, %cst {dimension_numbers = #tpu.dot_dimension_numbers<[1], [0], [0], [1], [0, 0, 1, 1], [], []>} : vector<16x32xf32>, vector<32x64xf32>, vector<16x64xf32> -> vector<16x64xf32>
    %c0_3 = arith.constant 0 : index
    %c0_4 = arith.constant 0 : index
    %3 = vector.load %arg3[%c0_3, %c0_4] : memref<1x64xf32, #tpu.memory_space<vmem>>, vector<1x64xf32>
    %4 = vector.broadcast %3 : vector<1x64xf32> to vector<16x64xf32>
    %5 = arith.addf %2, %4 : vector<16x64xf32>
    %cst_5 = arith.constant 5.000000e-01 : f32
    %6 = vector.broadcast %cst_5 : f32 to vector<16x64xf32>
    %7 = arith.mulf %6, %5 : vector<16x64xf32>
    %cst_6 = arith.constant 0.707106769 : f32
    %8 = vector.broadcast %cst_6 : f32 to vector<16x64xf32>
    %9 = arith.mulf %5, %8 : vector<16x64xf32>
    %10 = math.erf %9 : vector<16x64xf32>
    %cst_7 = arith.constant 1.000000e+00 : f32
    %11 = vector.broadcast %cst_7 : f32 to vector<16x64xf32>
    %12 = arith.addf %11, %10 : vector<16x64xf32>
    %13 = arith.mulf %7, %12 : vector<16x64xf32>
    %c0_8 = arith.constant 0 : index
    %c0_9 = arith.constant 0 : index
    %14 = vector.load %arg4[%c0_8, %c0_9] : memref<64x32xf32, #tpu.memory_space<vmem>>, vector<64x32xf32>
    %cst_10 = arith.constant dense<0.000000e+00> : vector<16x32xf32>
    %15 = tpu.matmul %13, %14, %cst_10 {dimension_numbers = #tpu.dot_dimension_numbers<[1], [0], [0], [1], [0, 0, 1, 1], [], []>} : vector<16x64xf32>, vector<64x32xf32>, vector<16x32xf32> -> vector<16x32xf32>
    %c0_11 = arith.constant 0 : index
    %c0_12 = arith.constant 0 : index
    %16 = vector.load %arg5[%c0_11, %c0_12] : memref<1x32xf32, #tpu.memory_space<vmem>>, vector<1x32xf32>
    %17 = vector.broadcast %16 : vector<1x32xf32> to vector<16x32xf32>
    %18 = arith.addf %15, %17 : vector<16x32xf32>
    %c0_13 = arith.constant 0 : index
    %c0_14 = arith.constant 0 : index
    %19 = vector.load %arg6[%c0_13, %c0_14] : memref<16x32xf32, #tpu.memory_space<vmem>>, vector<16x32xf32>
    tpu.vector_store %arg6[%c0_13, %c0_14], %18 {strides = array<i32>} : memref<16x32xf32, #tpu.memory_space<vmem>>, vector<16x32xf32>,
    return
  }
  func.func @transform_0(%arg0: i32) -> (i32, i32) {
    %c0_i32 = arith.constant 0 : i32
    %c0_i32_0 = arith.constant 0 : i32
    return %arg0, %c0_i32 : i32, i32
  }
  func.func @transform_1(%arg0: i32) -> (i32, i32) {
    %c0_i32 = arith.constant 0 : i32
    %c0_i32_0 = arith.constant 0 : i32
    %c0_i32_1 = arith.constant 0 : i32
    return %c0_i32, %c0_i32_0 : i32, i32
  }
  func.func @transform_2(%arg0: i32) -> (i32, i32) {
    %c0_i32 = arith.constant 0 : i32
    %c0_i32_0 = arith.constant 0 : i32
    %c0_i32_1 = arith.constant 0 : i32
    return %c0_i32, %c0_i32_0 : i32, i32
  }
  func.func @transform_3(%arg0: i32) -> (i32, i32) {
    %c0_i32 = arith.constant 0 : i32
    %c0_i32_0 = arith.constant 0 : i32
    %c0_i32_1 = arith.constant 0 : i32
    return %c0_i32, %c0_i32_0 : i32, i32
  }
  func.func @transform_4(%arg0: i32) -> (i32, i32) {
    %c0_i32 = arith.constant 0 : i32
    %c0_i32_0 = arith.constant 0 : i32
    %c0_i32_1 = arith.constant 0 : i32
    return %c0_i32, %c0_i32_0 : i32, i32
  }
  func.func @transform_5(%arg0: i32) -> (i32, i32) {
    %c0_i32 = arith.constant 0 : i32
    %c0_i32_0 = arith.constant 0 : i32
    return %arg0, %c0_i32 : i32, i32
  }
}

</mosaic_0001>

<llo_original>
// kernel: tpu_custom_call.1
$region0: #{tpu_custom_call.1}
  #allocation0 [shape = 'u32[]', space=smem, size = 0x4, offset = 0x4, fixed_abs, tag = 'smem constant byte address 0x4 - core index']
  #allocation1 [shape = 'u32[144,128]{1,0:T(1,128)}', space=vmem, size = 0x12000, scoped, tag = 'internal scratch']
  %s0 = inlined_call_operand.vmem [shape: f32[16,32], index: 0, kind: input, shape index: {}]
  %s1 = inlined_call_operand.vmem [shape: f32[32,64], index: 1, kind: input, shape index: {}]
  %s2 = inlined_call_operand.vmem [shape: f32[1,64], index: 2, kind: input, shape index: {}]
  %s3 = inlined_call_operand.vmem [shape: f32[64,32], index: 3, kind: input, shape index: {}]
  %s4 = inlined_call_operand.vmem [shape: f32[1,32], index: 4, kind: input, shape index: {}]
  %s5 = inlined_call_operand.hbm [shape: f32[16,32], index: 5, kind: output, shape index: {}]
  %s6 = sld [smem:[#allocation0]]
  $region30: #{tpu_custom_call.1} parent=0
    _
  %s8 = ssub.s32 1, %s6
  %s9 = scalar_select 0, %s8, %s6
  $region1: #{tpu_custom_call.1} parent=0
    #allocation2 [shape = 'u8[8192]{0}', space=vmem, size = 0x2000, scoped, tag = 'output window, operand 0, single buffered']
    #allocation3 [shape = 's32[1]{0}', space=sflag, size = 0x4, scoped, tag = 'scoped memory for tpu_custom_call.1']
    %10 = vsyncpa [#allocation3], 0
    // Predicated region
    $region2: #{tpu_custom_call.1} parent=1 // pred_check
      _
    $region3: #{tpu_custom_call.1} parent=1 // pred_check_branch
      %12 = sbr.rel (0) target = $region5
    $region4: #{tpu_custom_call.1} parent=1 // pred_region
      _
    $region5: #{tpu_custom_call.1} parent=1 // pred_fallthru
      _
    // Predicated region
    $region6: #{tpu_custom_call.1} parent=1 // pred_check
      _
    $region7: #{tpu_custom_call.1} parent=1 // pred_check_branch
      %14 = sbr.rel (0) target = $region9
    $region8: #{tpu_custom_call.1} parent=1 // pred_region
      _
    $region9: #{tpu_custom_call.1} parent=1 // pred_fallthru
      _
    // Predicated region
    $region10: #{tpu_custom_call.1} parent=1 // pred_check
      _
    $region11: #{tpu_custom_call.1} parent=1 // pred_check_branch
      %16 = sbr.rel (0) target = $region13
    $region12: #{tpu_custom_call.1} parent=1 // pred_region
      _
    $region13: #{tpu_custom_call.1} parent=1 // pred_fallthru
      _
    // Predicated region
    $region14: #{tpu_custom_call.1} parent=1 // pred_check
      _
    $region15: #{tpu_custom_call.1} parent=1 // pred_check_branch
      %18 = sbr.rel (0) target = $region17
    $region16: #{tpu_custom_call.1} parent=1 // pred_region
      _
    $region17: #{tpu_custom_call.1} parent=1 // pred_fallthru
      _
    // Predicated region
    $region18: #{tpu_custom_call.1} parent=1 // pred_check
      _
    $region19: #{tpu_custom_call.1} parent=1 // pred_check_branch
      %20 = sbr.rel (0) target = $region21
    $region20: #{tpu_custom_call.1} parent=1 // pred_region
      _
    $region21: #{tpu_custom_call.1} parent=1 // pred_fallthru
      _
    %v21 = vld [vmem:[%s0] sm:$0xff]
    %v22 = vld [vmem:[%s0 + $0x8] sm:$0xff]
    %v23 = vld [vmem:[%s1] sm:$0xff]
    %v24 = vld [vmem:[%s1 + $0x8] sm:$0xff]
    %v25 = vld [vmem:[%s1 + $0x10] sm:$0xff]
    %v26 = vld [vmem:[%s1 + $0x18] sm:$0xff]
    %v27 = vld [vmem:[%s2] sm:$0x1]
    %v29 = vlaneseq
    %v30 = vshrl.u32 %v29, 7
    %v31 = vsub.s32 0, %v30
    %v32 = vrot.slane %v27, %v31
    %vm34 = vcmask 261120
    %v36 = vsel %vm34, %v21, 0
    %v39 = vsel %vm34, %v22, 0
    %41 = vmatprep.subr.mxu0 0.0
    %42 = vmatpush1.msra.mxu0 0.0
    %43 = vmatprep.subr.mxu0 0.0
    %44 = vmatpush1.msra.mxu0 0.0
    %45 = vmatprep.subr.mxu0 0.0
    %46 = vmatpush1.msra.mxu0 0.0
    %47 = vmatprep.subr.mxu0 0.0
    %48 = vmatpush1.msra.mxu0 0.0
    %49 = vmatprep.subr.mxu0 0.0
    %50 = vmatpush1.msra.mxu0 0.0
    %51 = vmatprep.subr.mxu0 0.0
    %52 = vmatpush1.msra.mxu0 0.0
    %53 = vmatprep.subr.mxu0 0.0
    %54 = vmatpush1.msra.mxu0 0.0
    %55 = vmatprep.subr.mxu0 0.0
    %56 = vmatpush1.msra.mxu0 0.0
    %57 = vmatprep.subr.mxu0 0.0
    %58 = vmatpush1.msra.mxu0 0.0
    %59 = vmatprep.subr.mxu0 0.0
    %60 = vmatpush1.msra.mxu0 0.0
    %61 = vmatprep.subr.mxu0 0.0
    %62 = vmatpush1.msra.mxu0 0.0
    %63 = vmatprep.subr.mxu0 0.0
    %64 = vmatpush1.msra.mxu0 0.0
    %65 = vmatprep.subr.mxu0 0.0
    %66 = vmatpush1.msra.mxu0 %v26
    %67 = vmatprep.subr.mxu0 0.0
    %68 = vmatpush1.msra.mxu0 %v25
    %69 = vmatprep.subr.mxu0 0.0
    %70 = vmatpush1.msra.mxu0 %v24
    %71 = vmatprep.subr.mxu0 0.0
    %72 = vmatpush1.msra.mxu0 %v23
    %73 = vmatprep.subr.mxu0 0.0
    %74 = vmatpush2.msra.mxu0 0.0
    %75 = vmatprep.subr.mxu0 0.0
    %76 = vmatpush2.msra.mxu0 0.0
    %77 = vmatprep.subr.mxu0 0.0
    %78 = vmatpush2.msra.mxu0 0.0
    %79 = vmatprep.subr.mxu0 0.0
    %80 = vmatpush2.msra.mxu0 0.0
    %81 = vmatprep.subr.mxu0 0.0
    %82 = vmatpush2.msra.mxu0 0.0
    %83 = vmatprep.subr.mxu0 0.0
    %84 = vmatpush2.msra.mxu0 0.0
    %85 = vmatprep.subr.mxu0 0.0
    %86 = vmatpush2.msra.mxu0 0.0
    %87 = vmatprep.subr.mxu0 0.0
    %88 = vmatpush2.msra.mxu0 0.0
    %89 = vmatprep.subr.mxu0 0.0
    %90 = vmatpush2.msra.mxu0 0.0
    %91 = vmatprep.subr.mxu0 0.0
    %92 = vmatpush2.msra.mxu0 0.0
    %93 = vmatprep.subr.mxu0 0.0
    %94 = vmatpush2.msra.mxu0 0.0
    %95 = vmatprep.subr.mxu0 0.0
    %96 = vmatpush2.msra.mxu0 0.0
    %97 = vmatprep.subr.mxu0 0.0
    %98 = vmatpush2.msra.mxu0 0.0
    %99 = vmatprep.subr.mxu0 0.0
    %100 = vmatpush2.msra.mxu0 0.0
    %101 = vmatprep.subr.mxu0 0.0
    %102 = vmatpush2.msra.mxu0 0.0
    %103 = vmatprep.subr.mxu0 0.0
    %104 = vmatpush2.msra.mxu0 0.0
    %105 = vmatprep.mubr.f32.mxu0 0.0
    %106 = vmatmul.mubr.f32.gmra.mxu0 %v36
    %v107 = vpop.f32.mrf.mxu0
    %v108 = vadd.f32 %v32, %v107
    %v109 = vpop.f32.mrf.mxu0
    %110 = vmatprep.mubr.f32.mxu0 0.0
    %111 = vmatmul.mubr.f32.gmra.mxu0 %v39
    %v112 = vpop.f32.mrf.mxu0
    %v113 = vadd.f32 %v32, %v112
    %v114 = vpop.f32.mrf.mxu0
    %115 = vdwg.mxu0
    %v116 = vmul.f32 %v108, 0.5
    %v117 = vmul.f32 %v113, 0.5
    %v118 = vmul.f32 %v108, 0.70710677
    %v119 = vmul.f32 %v113, 0.70710677
    %v120 = verf.f32.pop %v118
    %v121 = verf.f32.pop %v119
    %v122 = vadd.f32 %v120, 1.0
    %v123 = vadd.f32 %v121, 1.0
    %v124 = vmul.f32 %v116, %v122
    %v125 = vmul.f32 %v117, %v123
    %v126 = vld [vmem:[%s3] sm:$0xff]
    %v127 = vld [vmem:[%s3 + $0x8] sm:$0xff]
    %v128 = vld [vmem:[%s3 + $0x10] sm:$0xff]
    %v129 = vld [vmem:[%s3 + $0x18] sm:$0xff]
    %v130 = vld [vmem:[%s3 + $0x20] sm:$0xff]
    %v131 = vld [vmem:[%s3 + $0x28] sm:$0xff]
    %v132 = vld [vmem:[%s3 + $0x30] sm:$0xff]
    %v133 = vld [vmem:[%s3 + $0x38] sm:$0xff]
    %v134 = vld [vmem:[%s4] sm:$0x1]
    %v136 = vlaneseq
    %v137 = vshrl.u32 %v136, 7
    %v138 = vsub.s32 0, %v137
    %v139 = vrot.slane %v134, %v138
    %vm141 = vcmask 523264
    %v143 = vsel %vm141, %v124, 0
    %v146 = vsel %vm141, %v125, 0
    %148 = vmatprep.subr.mxu0 0.0
    %149 = vmatpush1.msra.mxu0 0.0
    %150 = vmatprep.subr.mxu0 0.0
    %151 = vmatpush1.msra.mxu0 0.0
    %152 = vmatprep.subr.mxu0 0.0
    %153 = vmatpush1.msra.mxu0 0.0
    %154 = vmatprep.subr.mxu0 0.0
    %155 = vmatpush1.msra.mxu0 0.0
    %156 = vmatprep.subr.mxu0 0.0
    %157 = vmatpush1.msra.mxu0 0.0
    %158 = vmatprep.subr.mxu0 0.0
    %159 = vmatpush1.msra.mxu0 0.0
    %160 = vmatprep.subr.mxu0 0.0
    %161 = vmatpush1.msra.mxu0 0.0
    %162 = vmatprep.subr.mxu0 0.0
    %163 = vmatpush1.msra.mxu0 0.0
    %164 = vmatprep.subr.mxu0 0.0
    %165 = vmatpush1.msra.mxu0 %v133
    %166 = vmatprep.subr.mxu0 0.0
    %167 = vmatpush1.msra.mxu0 %v132
    %168 = vmatprep.subr.mxu0 0.0
    %169 = vmatpush1.msra.mxu0 %v131
    %170 = vmatprep.subr.mxu0 0.0
    %171 = vmatpush1.msra.mxu0 %v130
    %172 = vmatprep.subr.mxu0 0.0
    %173 = vmatpush1.msra.mxu0 %v129
    %174 = vmatprep.subr.mxu0 0.0
    %175 = vmatpush1.msra.mxu0 %v128
    %176 = vmatprep.subr.mxu0 0.0
    %177 = vmatpush1.msra.mxu0 %v127
    %178 = vmatprep.subr.mxu0 0.0
    %179 = vmatpush1.msra.mxu0 %v126
    %180 = vmatprep.subr.mxu0 0.0
    %181 = vmatpush2.msra.mxu0 0.0
    %182 = vmatprep.subr.mxu0 0.0
    %183 = vmatpush2.msra.mxu0 0.0
    %184 = vmatprep.subr.mxu0 0.0
    %185 = vmatpush2.msra.mxu0 0.0
    %186 = vmatprep.subr.mxu0 0.0
    %187 = vmatpush2.msra.mxu0 0.0
    %188 = vmatprep.subr.mxu0 0.0
    %189 = vmatpush2.msra.mxu0 0.0
    %190 = vmatprep.subr.mxu0 0.0
    %191 = vmatpush2.msra.mxu0 0.0
    %192 = vmatprep.subr.mxu0 0.0
    %193 = vmatpush2.msra.mxu0 0.0
    %194 = vmatprep.subr.mxu0 0.0
    %195 = vmatpush2.msra.mxu0 0.0
    %196 = vmatprep.subr.mxu0 0.0
    %197 = vmatpush2.msra.mxu0 0.0
    %198 = vmatprep.subr.mxu0 0.0
    %199 = vmatpush2.msra.mxu0 0.0
    %200 = vmatprep.subr.mxu0 0.0
    %201 = vmatpush2.msra.mxu0 0.0
    %202 = vmatprep.subr.mxu0 0.0
    %203 = vmatpush2.msra.mxu0 0.0
    %204 = vmatprep.subr.mxu0 0.0
    %205 = vmatpush2.msra.mxu0 0.0
    %206 = vmatprep.subr.mxu0 0.0
    %207 = vmatpush2.msra.mxu0 0.0
    %208 = vmatprep.subr.mxu0 0.0
    %209 = vmatpush2.msra.mxu0 0.0
    %210 = vmatprep.subr.mxu0 0.0
    %211 = vmatpush2.msra.mxu0 0.0
    %212 = vmatprep.mubr.f32.mxu0 0.0
    %213 = vmatmul.mubr.f32.gmra.mxu0 %v143
    %v214 = vpop.f32.mrf.mxu0
    %v215 = vadd.f32 %v139, %v214
    %v216 = vpop.f32.mrf.mxu0
    %217 = vmatprep.mubr.f32.mxu0 0.0
    %218 = vmatmul.mubr.f32.gmra.mxu0 %v146
    %v219 = vpop.f32.mrf.mxu0
    %v220 = vadd.f32 %v139, %v219
    %v221 = vpop.f32.mrf.mxu0
    %222 = vdwg.mxu0
    %223 = vst.msk [vmem:[#allocation2] sm:$0xff] %vm34, %v215
    %224 = vst.msk [vmem:[#allocation2 + $0x8] sm:$0xff] %vm34, %v220
    // Predicated region
    $region22: #{tpu_custom_call.1} parent=1 // pred_check
      _
    $region23: #{tpu_custom_call.1} parent=1 // pred_check_branch
      %226 = sbr.rel (0) target = $region25
    $region24: #{tpu_custom_call.1} parent=1 // pred_region
      %s228 = ssub.s32 256, 256
      %229 = vsyncadd [#allocation3], %s228
      %s230 = sshll.u32 [#allocation2], 4
      %s231 = int_to_ptr.vmem [resolvable:$true] %s230
      %236 = dma.vmem_to_hbm [thread:$0]  %s231, 256, %s5, [#allocation3], 128, 128, 8
    $region25: #{tpu_custom_call.1} parent=1 // pred_fallthru
      _
    // Predicated region
    $region26: #{tpu_custom_call.1} parent=1 // pred_check
      _
    $region27: #{tpu_custom_call.1} parent=1 // pred_check_branch
      %238 = sbr.rel (0) target = $region29
    $region28: #{tpu_custom_call.1} parent=1 // pred_region
      %239 = dma.done [#allocation3], 256
    $region29: #{tpu_custom_call.1} parent=1 // pred_fallthru
      _
    %240 = vsyncpa [#allocation3], 1

// kernel: tpu_custom_call.1
$region0: #{tpu_custom_call.1}
  #allocation0 [shape = 'u32[]', space=smem, size = 0x4, offset = 0x4, fixed_abs, tag = 'smem constant byte address 0x4 - core index']
  #allocation1 [shape = 'u32[144,128]{1,0:T(1,128)}', space=vmem, size = 0x12000, scoped, tag = 'internal scratch']
  %s0 = inlined_call_operand.vmem [shape: f32[16,32], index: 0, kind: input, shape index: {}]
  %s1 = inlined_call_operand.vmem [shape: f32[32,64], index: 1, kind: input, shape index: {}]
  %s2 = inlined_call_operand.vmem [shape: f32[1,64], index: 2, kind: input, shape index: {}]
  %s3 = inlined_call_operand.vmem [shape: f32[64,32], index: 3, kind: input, shape index: {}]
  %s4 = inlined_call_operand.vmem [shape: f32[1,32], index: 4, kind: input, shape index: {}]
  %s5 = inlined_call_operand.hbm [shape: f32[16,32], index: 5, kind: output, shape index: {}]
  %s6 = sld [smem:[#allocation0]]
  $region30: #{tpu_custom_call.1} parent=0
    _
  %s8 = ssub.s32 1, %s6
  %s9 = scalar_select 0, %s8, %s6
  $region1: #{tpu_custom_call.1} parent=0
    #allocation2 [shape = 'u8[8192]{0}', space=vmem, size = 0x2000, scoped, tag = 'output window, operand 0, single buffered']
    #allocation3 [shape = 's32[1]{0}', space=sflag, size = 0x4, scoped, tag = 'scoped memory for tpu_custom_call.1']
    %10 = vsyncpa [#allocation3], 0
    // Predicated region
    $region2: #{tpu_custom_call.1} parent=1 // pred_check
      _
    $region3: #{tpu_custom_call.1} parent=1 // pred_check_branch
      %12 = sbr.rel (0) target = $region5
    $region4: #{tpu_custom_call.1} parent=1 // pred_region
      _
    $region5: #{tpu_custom_call.1} parent=1 // pred_fallthru
      _
    // Predicated region
    $region6: #{tpu_custom_call.1} parent=1 // pred_check
      _
    $region7: #{tpu_custom_call.1} parent=1 // pred_check_branch
      %14 = sbr.rel (0) target = $region9
    $region8: #{tpu_custom_call.1} parent=1 // pred_region
      _
    $region9: #{tpu_custom_call.1} parent=1 // pred_fallthru
      _
    // Predicated region
    $region10: #{tpu_custom_call.1} parent=1 // pred_check
      _
    $region11: #{tpu_custom_call.1} parent=1 // pred_check_branch
      %16 = sbr.rel (0) target = $region13
    $region12: #{tpu_custom_call.1} parent=1 // pred_region
      _
    $region13: #{tpu_custom_call.1} parent=1 // pred_fallthru
      _
    // Predicated region
    $region14: #{tpu_custom_call.1} parent=1 // pred_check
      _
    $region15: #{tpu_custom_call.1} parent=1 // pred_check_branch
      %18 = sbr.rel (0) target = $region17
    $region16: #{tpu_custom_call.1} parent=1 // pred_region
      _
    $region17: #{tpu_custom_call.1} parent=1 // pred_fallthru
      _
    // Predicated region
    $region18: #{tpu_custom_call.1} parent=1 // pred_check
      _
    $region19: #{tpu_custom_call.1} parent=1 // pred_check_branch
      %20 = sbr.rel (0) target = $region21
    $region20: #{tpu_custom_call.1} parent=1 // pred_region
      _
    $region21: #{tpu_custom_call.1} parent=1 // pred_fallthru
      _
    %v21 = vld [vmem:[%s0] sm:$0xff]
    %v22 = vld [vmem:[%s0 + $0x8] sm:$0xff]
    %v23 = vld [vmem:[%s1] sm:$0xff]
    %v24 = vld [vmem:[%s1 + $0x8] sm:$0xff]
    %v25 = vld [vmem:[%s1 + $0x10] sm:$0xff]
    %v26 = vld [vmem:[%s1 + $0x18] sm:$0xff]
    %v27 = vld [vmem:[%s2] sm:$0x1]
    %v29 = vlaneseq
    %v30 = vshrl.u32 %v29, 7
    %v31 = vsub.s32 0, %v30
    %v32 = vrot.slane %v27, %v31
    %vm34 = vcmask 261120
    %v36 = vsel %vm34, %v21, 0
    %v39 = vsel %vm34, %v22, 0
    %41 = vmatprep.subr.mxu0 0.0
    %42 = vmatpush1.msra.mxu0 0.0
    %43 = vmatprep.subr.mxu0 0.0
    %44 = vmatpush1.msra.mxu0 0.0
    %45 = vmatprep.subr.mxu0 0.0
    %46 = vmatpush1.msra.mxu0 0.0
    %47 = vmatprep.subr.mxu0 0.0
    %48 = vmatpush1.msra.mxu0 0.0
    %49 = vmatprep.subr.mxu0 0.0
    %50 = vmatpush1.msra.mxu0 0.0
    %51 = vmatprep.subr.mxu0 0.0
    %52 = vmatpush1.msra.mxu0 0.0
    %53 = vmatprep.subr.mxu0 0.0
    %54 = vmatpush1.msra.mxu0 0.0
    %55 = vmatprep.subr.mxu0 0.0
    %56 = vmatpush1.msra.mxu0 0.0
    %57 = vmatprep.subr.mxu0 0.0
    %58 = vmatpush1.msra.mxu0 0.0
    %59 = vmatprep.subr.mxu0 0.0
    %60 = vmatpush1.msra.mxu0 0.0
    %61 = vmatprep.subr.mxu0 0.0
    %62 = vmatpush1.msra.mxu0 0.0
    %63 = vmatprep.subr.mxu0 0.0
    %64 = vmatpush1.msra.mxu0 0.0
    %65 = vmatprep.subr.mxu0 0.0
    %66 = vmatpush1.msra.mxu0 %v26
    %67 = vmatprep.subr.mxu0 0.0
    %68 = vmatpush1.msra.mxu0 %v25
    %69 = vmatprep.subr.mxu0 0.0
    %70 = vmatpush1.msra.mxu0 %v24
    %71 = vmatprep.subr.mxu0 0.0
    %72 = vmatpush1.msra.mxu0 %v23
    %73 = vmatprep.subr.mxu0 0.0
    %74 = vmatpush2.msra.mxu0 0.0
    %75 = vmatprep.subr.mxu0 0.0
    %76 = vmatpush2.msra.mxu0 0.0
    %77 = vmatprep.subr.mxu0 0.0
    %78 = vmatpush2.msra.mxu0 0.0
    %79 = vmatprep.subr.mxu0 0.0
    %80 = vmatpush2.msra.mxu0 0.0
    %81 = vmatprep.subr.mxu0 0.0
    %82 = vmatpush2.msra.mxu0 0.0
    %83 = vmatprep.subr.mxu0 0.0
    %84 = vmatpush2.msra.mxu0 0.0
    %85 = vmatprep.subr.mxu0 0.0
    %86 = vmatpush2.msra.mxu0 0.0
    %87 = vmatprep.subr.mxu0 0.0
    %88 = vmatpush2.msra.mxu0 0.0
    %89 = vmatprep.subr.mxu0 0.0
    %90 = vmatpush2.msra.mxu0 0.0
    %91 = vmatprep.subr.mxu0 0.0
    %92 = vmatpush2.msra.mxu0 0.0
    %93 = vmatprep.subr.mxu0 0.0
    %94 = vmatpush2.msra.mxu0 0.0
    %95 = vmatprep.subr.mxu0 0.0
    %96 = vmatpush2.msra.mxu0 0.0
    %97 = vmatprep.subr.mxu0 0.0
    %98 = vmatpush2.msra.mxu0 0.0
    %99 = vmatprep.subr.mxu0 0.0
    %100 = vmatpush2.msra.mxu0 0.0
    %101 = vmatprep.subr.mxu0 0.0
    %102 = vmatpush2.msra.mxu0 0.0
    %103 = vmatprep.subr.mxu0 0.0
    %104 = vmatpush2.msra.mxu0 0.0
    %105 = vmatprep.mubr.f32.mxu0 0.0
    %106 = vmatmul.mubr.f32.gmra.mxu0 %v36
    %v107 = vpop.f32.mrf.mxu0
    %v108 = vadd.f32 %v32, %v107
    %v109 = vpop.f32.mrf.mxu0
    %110 = vmatprep.mubr.f32.mxu0 0.0
    %111 = vmatmul.mubr.f32.gmra.mxu0 %v39
    %v112 = vpop.f32.mrf.mxu0
    %v113 = vadd.f32 %v32, %v112
    %v114 = vpop.f32.mrf.mxu0
    %115 = vdwg.mxu0
    %v116 = vmul.f32 %v108, 0.5
    %v117 = vmul.f32 %v113, 0.5
    %v118 = vmul.f32 %v108, 0.70710677
    %v119 = vmul.f32 %v113, 0.70710677
    %v120 = verf.f32.pop %v118
    %v121 = verf.f32.pop %v119
    %v122 = vadd.f32 %v120, 1.0
    %v123 = vadd.f32 %v121, 1.0
    %v124 = vmul.f32 %v116, %v122
    %v125 = vmul.f32 %v117, %v123
    %v126 = vld [vmem:[%s3] sm:$0xff]
    %v127 = vld [vmem:[%s3 + $0x8] sm:$0xff]
    %v128 = vld [vmem:[%s3 + $0x10] sm:$0xff]
    %v129 = vld [vmem:[%s3 + $0x18] sm:$0xff]
    %v130 = vld [vmem:[%s3 + $0x20] sm:$0xff]
    %v131 = vld [vmem:[%s3 + $0x28] sm:$0xff]
    %v132 = vld [vmem:[%s3 + $0x30] sm:$0xff]
    %v133 = vld [vmem:[%s3 + $0x38] sm:$0xff]
    %v134 = vld [vmem:[%s4] sm:$0x1]
    %v136 = vlaneseq
    %v137 = vshrl.u32 %v136, 7
    %v138 = vsub.s32 0, %v137
    %v139 = vrot.slane %v134, %v138
    %vm141 = vcmask 523264
    %v143 = vsel %vm141, %v124, 0
    %v146 = vsel %vm141, %v125, 0
    %148 = vmatprep.subr.mxu0 0.0
    %149 = vmatpush1.msra.mxu0 0.0
    %150 = vmatprep.subr.mxu0 0.0
    %151 = vmatpush1.msra.mxu0 0.0
    %152 = vmatprep.subr.mxu0 0.0
    %153 = vmatpush1.msra.mxu0 0.0
    %154 = vmatprep.subr.mxu0 0.0
    %155 = vmatpush1.msra.mxu0 0.0
    %156 = vmatprep.subr.mxu0 0.0
    %157 = vmatpush1.msra.mxu0 0.0
    %158 = vmatprep.subr.mxu0 0.0
    %159 = vmatpush1.msra.mxu0 0.0
    %160 = vmatprep.subr.mxu0 0.0
    %161 = vmatpush1.msra.mxu0 0.0
    %162 = vmatprep.subr.mxu0 0.0
    %163 = vmatpush1.msra.mxu0 0.0
    %164 = vmatprep.subr.mxu0 0.0
    %165 = vmatpush1.msra.mxu0 %v133
    %166 = vmatprep.subr.mxu0 0.0
    %167 = vmatpush1.msra.mxu0 %v132
    %168 = vmatprep.subr.mxu0 0.0
    %169 = vmatpush1.msra.mxu0 %v131
    %170 = vmatprep.subr.mxu0 0.0
    %171 = vmatpush1.msra.mxu0 %v130
    %172 = vmatprep.subr.mxu0 0.0
    %173 = vmatpush1.msra.mxu0 %v129
    %174 = vmatprep.subr.mxu0 0.0
    %175 = vmatpush1.msra.mxu0 %v128
    %176 = vmatprep.subr.mxu0 0.0
    %177 = vmatpush1.msra.mxu0 %v127
    %178 = vmatprep.subr.mxu0 0.0
    %179 = vmatpush1.msra.mxu0 %v126
    %180 = vmatprep.subr.mxu0 0.0
    %181 = vmatpush2.msra.mxu0 0.0
    %182 = vmatprep.subr.mxu0 0.0
    %183 = vmatpush2.msra.mxu0 0.0
    %184 = vmatprep.subr.mxu0 0.0
    %185 = vmatpush2.msra.mxu0 0.0
    %186 = vmatprep.subr.mxu0 0.0
    %187 = vmatpush2.msra.mxu0 0.0
    %188 = vmatprep.subr.mxu0 0.0
    %189 = vmatpush2.msra.mxu0 0.0
    %190 = vmatprep.subr.mxu0 0.0
    %191 = vmatpush2.msra.mxu0 0.0
    %192 = vmatprep.subr.mxu0 0.0
    %193 = vmatpush2.msra.mxu0 0.0
    %194 = vmatprep.subr.mxu0 0.0
    %195 = vmatpush2.msra.mxu0 0.0
    %196 = vmatprep.subr.mxu0 0.0
    %197 = vmatpush2.msra.mxu0 0.0
    %198 = vmatprep.subr.mxu0 0.0
    %199 = vmatpush2.msra.mxu0 0.0
    %200 = vmatprep.subr.mxu0 0.0
    %201 = vmatpush2.msra.mxu0 0.0
    %202 = vmatprep.subr.mxu0 0.0
    %203 = vmatpush2.msra.mxu0 0.0
    %204 = vmatprep.subr.mxu0 0.0
    %205 = vmatpush2.msra.mxu0 0.0
    %206 = vmatprep.subr.mxu0 0.0
    %207 = vmatpush2.msra.mxu0 0.0
    %208 = vmatprep.subr.mxu0 0.0
    %209 = vmatpush2.msra.mxu0 0.0
    %210 = vmatprep.subr.mxu0 0.0
    %211 = vmatpush2.msra.mxu0 0.0
    %212 = vmatprep.mubr.f32.mxu0 0.0
    %213 = vmatmul.mubr.f32.gmra.mxu0 %v143
    %v214 = vpop.f32.mrf.mxu0
    %v215 = vadd.f32 %v139, %v214
    %v216 = vpop.f32.mrf.mxu0
    %217 = vmatprep.mubr.f32.mxu0 0.0
    %218 = vmatmul.mubr.f32.gmra.mxu0 %v146
    %v219 = vpop.f32.mrf.mxu0
    %v220 = vadd.f32 %v139, %v219
    %v221 = vpop.f32.mrf.mxu0
    %222 = vdwg.mxu0
    %223 = vst.msk [vmem:[#allocation2] sm:$0xff] %vm34, %v215
    %224 = vst.msk [vmem:[#allocation2 + $0x8] sm:$0xff] %vm34, %v220
    // Predicated region
    $region22: #{tpu_custom_call.1} parent=1 // pred_check
      _
    $region23: #{tpu_custom_call.1} parent=1 // pred_check_branch
      %226 = sbr.rel (0) target = $region25
    $region24: #{tpu_custom_call.1} parent=1 // pred_region
      %s228 = ssub.s32 256, 256
      %229 = vsyncadd [#allocation3], %s228
      %s230 = sshll.u32 [#allocation2], 4
      %s231 = int_to_ptr.vmem [resolvable:$true] %s230
      %236 = dma.vmem_to_hbm [thread:$0]  %s231, 256, %s5, [#allocation3], 128, 128, 8
    $region25: #{tpu_custom_call.1} parent=1 // pred_fallthru
      _
    // Predicated region
    $region26: #{tpu_custom_call.1} parent=1 // pred_check
      _
    $region27: #{tpu_custom_call.1} parent=1 // pred_check_branch
      %238 = sbr.rel (0) target = $region29
    $region28: #{tpu_custom_call.1} parent=1 // pred_region
      %239 = dma.done [#allocation3], 256
    $region29: #{tpu_custom_call.1} parent=1 // pred_fallthru
      _
    %240 = vsyncpa [#allocation3], 1

</llo_original>
